<compile_context>
chip_gen: v6e
topology: v6e:2x2x1
jax: 0.10.0
libtpu: 0.0.40
codegen_flags: <defaults>
</compile_context>

<pallas_src>
import functools

import jax
import jax.numpy as jnp
from jax.experimental import pallas as pl
from jax.experimental.pallas import tpu as pltpu


FEATURES = 8
SAMPLES_PER_ROW = 128 // FEATURES   # 16 samples interleaved per 128-lane row
TILE_ROWS = 4096                    # 64K samples (2 MiB of input) per grid step


def _mlp_kernel(x_ref, w0_ref, b0_ref, w1_ref, b1_ref, w2_ref, b2_ref, o_ref):
    # x_ref : [T, 128]  -- 16 samples per row, 8 features interleaved on lanes
    # w*_ref: block-diagonal kron(I_16, W_l.T); b*_ref: per-lane tiled biases
    # o_ref : [T, 16]   -- one prediction per interleaved sample (dense)
    x = x_ref[...]

    # dense_00 + ReLU : [T,128] @ [128,64] -> [T,64]
    h = jnp.dot(x, w0_ref[...], preferred_element_type=jnp.float32) + b0_ref[...]
    h = jnp.maximum(h, 0.0)

    # dense_01 + ReLU : [T,64] @ [64,64] -> [T,64]
    h = jnp.dot(h, w1_ref[...], preferred_element_type=jnp.float32) + b1_ref[...]
    h = jnp.maximum(h, 0.0)

    # dense_02 + Sigmoid : [T,64] @ [64,16] -> [T,16]
    z = jnp.dot(h, w2_ref[...], preferred_element_type=jnp.float32) + b2_ref[...]
    # sigmoid(z) = 0.5 * tanh(z/2) + 0.5  (single EUP transcendental)
    o_ref[...] = (0.5 * jnp.tanh(0.5 * z) + 0.5).astype(o_ref.dtype)


@functools.partial(jax.jit, static_argnames=("tile_rows",))
def classifier_forward(x, params, tile_rows=TILE_ROWS):
    """x: [B, 8] float32 (torch layout); returns [B, 1] float32."""
    B = x.shape[0]
    assert x.shape[1] == FEATURES
    x = x.astype(jnp.float32)

    # Pad batch to a multiple of 128 samples only when needed; otherwise the
    # [B, 8] -> [B/16, 128] reshape is metadata-only (no extra HBM pass).
    b_pad = pl.cdiv(B, 128) * 128
    if b_pad != B:
        x = jnp.pad(x, ((0, b_pad - B), (0, 0)))
    rows = b_pad // SAMPLES_PER_ROW           # multiple of 8
    xr = x.reshape(rows, 128)                 # row-major: metadata-only

    t_rows = min(tile_rows, rows)
    grid = (pl.cdiv(rows, t_rows),)

    # Block-diagonal weights: kron(I_16, W.T) applies the layer independently to
    # each of the 16 interleaved samples of a row in one lane-dense MXU matmul.
    eye = jnp.eye(SAMPLES_PER_ROW, dtype=jnp.float32)
    w0 = jnp.kron(eye, params["w0"].T)                        # [128, 64]
    w1 = jnp.kron(eye, params["w1"].T)                        # [64, 64]
    w2 = jnp.kron(eye, params["w2"].T)                        # [64, 16]
    b0 = jnp.tile(params["b0"], SAMPLES_PER_ROW)[None, :]     # [1, 64]
    b1 = jnp.tile(params["b1"], SAMPLES_PER_ROW)[None, :]     # [1, 64]
    b2 = jnp.tile(params["b2"], SAMPLES_PER_ROW)[None, :]     # [1, 16]

    def resident(shape):
        # Constant index_map -> block stays VMEM-resident across all grid steps.
        return pl.BlockSpec(shape, lambda i: (0, 0))

    out = pl.pallas_call(
        _mlp_kernel,
        out_shape=jax.ShapeDtypeStruct((rows, SAMPLES_PER_ROW), jnp.float32),
        grid=grid,
        in_specs=[
            pl.BlockSpec((t_rows, 128), lambda i: (i, 0)),   # x tile (pipelined)
            resident((128, 64)), resident((1, 64)),          # w0, b0 (resident)
            resident((64, 64)), resident((1, 64)),           # w1, b1
            resident((64, 16)), resident((1, 16)),           # w2, b2
        ],
        out_specs=pl.BlockSpec((t_rows, SAMPLES_PER_ROW), lambda i: (i, 0)),
        compiler_params=pltpu.CompilerParams(
            dimension_semantics=("parallel",),               # v7x: both TCs
            vmem_limit_bytes=32 * 1024 * 1024,
        ),
    )(xr, w0, b0, w1, b1, w2, b2)

    # [rows, 16] row-major == flat [b_pad]; slice back to B -> torch [B, 1].
    return out.reshape(b_pad)[:B][:, None]


def init_params(key):
    """Mirror torch module init: weights ~ U(0,1) (nn.init.uniform_), biases
    ~ U(-1/sqrt(fan_in), 1/sqrt(fan_in)) (nn.Linear default).  Weights kept in
    torch [F_out, F_in] layout; biases stored as [F_out] vectors."""
    k = jax.random.split(key, 6)

    def bias(kk, fan_in, fan_out):
        bound = 1.0 / jnp.sqrt(jnp.float32(fan_in))
        return jax.random.uniform(kk, (fan_out,), jnp.float32, -bound, bound)

    return {
        "w0": jax.random.uniform(k[0], (4, 8), jnp.float32, 0.0, 1.0),
        "b0": bias(k[1], 8, 4),
        "w1": jax.random.uniform(k[2], (4, 4), jnp.float32, 0.0, 1.0),
        "b1": bias(k[3], 4, 4),
        "w2": jax.random.uniform(k[4], (1, 4), jnp.float32, 0.0, 1.0),
        "b2": bias(k[5], 4, 1),
    }


def _reference_forward(x, p):
    hp = jax.lax.Precision.HIGHEST
    h = jnp.maximum(jnp.dot(x, p["w0"].T, precision=hp) + p["b0"], 0.0)
    h = jnp.maximum(jnp.dot(h, p["w1"].T, precision=hp) + p["b1"], 0.0)
    z = jnp.dot(h, p["w2"].T, precision=hp) + p["b2"]
    return jax.nn.sigmoid(z)


if __name__ == "__main__":
    key = jax.random.PRNGKey(0)
    k_param, k_x = jax.random.split(key)

    params = init_params(k_param)
    x = jax.random.normal(k_x, (2, 8), jnp.float32)  # batch=2, features=8

    out = classifier_forward(x, params)
    out = jax.block_until_ready(out)

    ref = _reference_forward(x, params)
    assert out.shape == (2, 1), out.shape
    assert jnp.allclose(out, ref, atol=1e-5, rtol=1e-4), (out, ref)

    print("KERNEL_OK")
</pallas_src>

<mosaic_0001>
module attributes {stable_mosaic.version = 11 : i64} {
  func.func @_mlp_kernel(%arg0: i32, %arg1: memref<8x128xf32, #tpu.memory_space<vmem>>, %arg2: memref<128x64xf32, #tpu.memory_space<vmem>>, %arg3: memref<1x64xf32, #tpu.memory_space<vmem>>, %arg4: memref<64x64xf32, #tpu.memory_space<vmem>>, %arg5: memref<1x64xf32, #tpu.memory_space<vmem>>, %arg6: memref<64x16xf32, #tpu.memory_space<vmem>>, %arg7: memref<1x16xf32, #tpu.memory_space<vmem>>, %arg8: memref<8x16xf32, #tpu.memory_space<vmem>>) attributes {dimension_semantics = [#tpu.dimension_semantics<parallel>], iteration_bounds = array<i64: 1>, scalar_prefetch = 0 : i64, scratch_operands = 0 : i64, tpu.core_type = #tpu.core_type<tc>, window_params = [{transform_indices = @transform_0, window_bounds = array<i64: 8, 128>}, {pipeline_mode = #tpu.pipeline_mode<synchronous>, transform_indices = @transform_1, window_bounds = array<i64: 128, 64>}, {pipeline_mode = #tpu.pipeline_mode<synchronous>, transform_indices = @transform_2, window_bounds = array<i64: 1, 64>}, {pipeline_mode = #tpu.pipeline_mode<synchronous>, transform_indices = @transform_3, window_bounds = array<i64: 64, 64>}, {pipeline_mode = #tpu.pipeline_mode<synchronous>, transform_indices = @transform_4, window_bounds = array<i64: 1, 64>}, {pipeline_mode = #tpu.pipeline_mode<synchronous>, transform_indices = @transform_5, window_bounds = array<i64: 64, 16>}, {pipeline_mode = #tpu.pipeline_mode<synchronous>, transform_indices = @transform_6, window_bounds = array<i64: 1, 16>}, {transform_indices = @transform_7, window_bounds = array<i64: 8, 16>}]} {
    %c0 = arith.constant 0 : index
    %c0_0 = arith.constant 0 : index
    %0 = vector.load %arg1[%c0, %c0_0] : memref<8x128xf32, #tpu.memory_space<vmem>>, vector<8x128xf32>
    %c0_1 = arith.constant 0 : index
    %c0_2 = arith.constant 0 : index
    %1 = vector.load %arg2[%c0_1, %c0_2] : memref<128x64xf32, #tpu.memory_space<vmem>>, vector<128x64xf32>
    %cst = arith.constant dense<0.000000e+00> : vector<8x64xf32>
    %2 = tpu.matmul %0, %1, %cst {dimension_numbers = #tpu.dot_dimension_numbers<[1], [0], [0], [1], [0, 0, 1, 1], [], []>} : vector<8x128xf32>, vector<128x64xf32>, vector<8x64xf32> -> vector<8x64xf32>
    %c0_3 = arith.constant 0 : index
    %c0_4 = arith.constant 0 : index
    %3 = vector.load %arg3[%c0_3, %c0_4] : memref<1x64xf32, #tpu.memory_space<vmem>>, vector<1x64xf32>
    %4 = vector.broadcast %3 : vector<1x64xf32> to vector<8x64xf32>
    %5 = arith.addf %2, %4 : vector<8x64xf32>
    %cst_5 = arith.constant 0.000000e+00 : f32
    %6 = vector.broadcast %cst_5 : f32 to vector<8x64xf32>
    %7 = arith.maximumf %5, %6 : vector<8x64xf32>
    %c0_6 = arith.constant 0 : index
    %c0_7 = arith.constant 0 : index
    %8 = vector.load %arg4[%c0_6, %c0_7] : memref<64x64xf32, #tpu.memory_space<vmem>>, vector<64x64xf32>
    %cst_8 = arith.constant dense<0.000000e+00> : vector<8x64xf32>
    %9 = tpu.matmul %7, %8, %cst_8 {dimension_numbers = #tpu.dot_dimension_numbers<[1], [0], [0], [1], [0, 0, 1, 1], [], []>} : vector<8x64xf32>, vector<64x64xf32>, vector<8x64xf32> -> vector<8x64xf32>
    %c0_9 = arith.constant 0 : index
    %c0_10 = arith.constant 0 : index
    %10 = vector.load %arg5[%c0_9, %c0_10] : memref<1x64xf32, #tpu.memory_space<vmem>>, vector<1x64xf32>
    %11 = vector.broadcast %10 : vector<1x64xf32> to vector<8x64xf32>
    %12 = arith.addf %9, %11 : vector<8x64xf32>
    %cst_11 = arith.constant 0.000000e+00 : f32
    %13 = vector.broadcast %cst_11 : f32 to vector<8x64xf32>
    %14 = arith.maximumf %12, %13 : vector<8x64xf32>
    %c0_12 = arith.constant 0 : index
    %c0_13 = arith.constant 0 : index
    %15 = vector.load %arg6[%c0_12, %c0_13] : memref<64x16xf32, #tpu.memory_space<vmem>>, vector<64x16xf32>
    %cst_14 = arith.constant dense<0.000000e+00> : vector<8x16xf32>
    %16 = tpu.matmul %14, %15, %cst_14 {dimension_numbers = #tpu.dot_dimension_numbers<[1], [0], [0], [1], [0, 0, 1, 1], [], []>} : vector<8x64xf32>, vector<64x16xf32>, vector<8x16xf32> -> vector<8x16xf32>
    %c0_15 = arith.constant 0 : index
    %c0_16 = arith.constant 0 : index
    %17 = vector.load %arg7[%c0_15, %c0_16] : memref<1x16xf32, #tpu.memory_space<vmem>>, vector<1x16xf32>
    %18 = vector.broadcast %17 : vector<1x16xf32> to vector<8x16xf32>
    %19 = arith.addf %16, %18 : vector<8x16xf32>
    %cst_17 = arith.constant 5.000000e-01 : f32
    %20 = vector.broadcast %cst_17 : f32 to vector<8x16xf32>
    %21 = arith.mulf %20, %19 : vector<8x16xf32>
    %22 = math.tanh %21 : vector<8x16xf32>
    %cst_18 = arith.constant 5.000000e-01 : f32
    %23 = vector.broadcast %cst_18 : f32 to vector<8x16xf32>
    %24 = arith.mulf %23, %22 : vector<8x16xf32>
    %cst_19 = arith.constant 5.000000e-01 : f32
    %25 = vector.broadcast %cst_19 : f32 to vector<8x16xf32>
    %26 = arith.addf %24, %25 : vector<8x16xf32>
    %c0_20 = arith.constant 0 : index
    %c0_21 = arith.constant 0 : index
    %27 = vector.load %arg8[%c0_20, %c0_21] : memref<8x16xf32, #tpu.memory_space<vmem>>, vector<8x16xf32>
    tpu.vector_store %arg8[%c0_20, %c0_21], %26 {strides = array<i32>} : memref<8x16xf32, #tpu.memory_space<vmem>>, vector<8x16xf32>,
    return
  }
  func.func @transform_0(%arg0: i32) -> (i32, i32) {
    %c0_i32 = arith.constant 0 : i32
    %c0_i32_0 = arith.constant 0 : i32
    return %arg0, %c0_i32 : i32, i32
  }
  func.func @transform_1(%arg0: i32) -> (i32, i32) {
    %c0_i32 = arith.constant 0 : i32
    %c0_i32_0 = arith.constant 0 : i32
    %c0_i32_1 = arith.constant 0 : i32
    return %c0_i32, %c0_i32_0 : i32, i32
  }
  func.func @transform_2(%arg0: i32) -> (i32, i32) {
    %c0_i32 = arith.constant 0 : i32
    %c0_i32_0 = arith.constant 0 : i32
    %c0_i32_1 = arith.constant 0 : i32
    return %c0_i32, %c0_i32_0 : i32, i32
  }
  func.func @transform_3(%arg0: i32) -> (i32, i32) {
    %c0_i32 = arith.constant 0 : i32
    %c0_i32_0 = arith.constant 0 : i32
    %c0_i32_1 = arith.constant 0 : i32
    return %c0_i32, %c0_i32_0 : i32, i32
  }
  func.func @transform_4(%arg0: i32) -> (i32, i32) {
    %c0_i32 = arith.constant 0 : i32
    %c0_i32_0 = arith.constant 0 : i32
    %c0_i32_1 = arith.constant 0 : i32
    return %c0_i32, %c0_i32_0 : i32, i32
  }
  func.func @transform_5(%arg0: i32) -> (i32, i32) {
    %c0_i32 = arith.constant 0 : i32
    %c0_i32_0 = arith.constant 0 : i32
    %c0_i32_1 = arith.constant 0 : i32
    return %c0_i32, %c0_i32_0 : i32, i32
  }
  func.func @transform_6(%arg0: i32) -> (i32, i32) {
    %c0_i32 = arith.constant 0 : i32
    %c0_i32_0 = arith.constant 0 : i32
    %c0_i32_1 = arith.constant 0 : i32
    return %c0_i32, %c0_i32_0 : i32, i32
  }
  func.func @transform_7(%arg0: i32) -> (i32, i32) {
    %c0_i32 = arith.constant 0 : i32
    %c0_i32_0 = arith.constant 0 : i32
    return %arg0, %c0_i32 : i32, i32
  }
}

</mosaic_0001>

<llo_original>
// kernel: tile.18
$region0: #{tile.18}
  #allocation0 [shape = 's32[1]{0}', space=sflag, size = 0x4, scoped, tag = 'scoped memory for tile.18']
  %s0 = inlined_call_operand.vmem [shape: f32[4], index: 0, kind: input, shape index: {}]
  %s1 = inlined_call_operand.vmem [shape: f32[16,4], index: 1, kind: output, shape index: {}]
  // Predicated region
  $region2: #{tile.18} parent=0 // pred_check
    _
  $region3: #{tile.18} parent=0 // pred_check_branch
    %3 = sbr.rel (0) target = $region5
  $region4: #{tile.18} parent=0 // pred_region
    _
  $region5: #{tile.18} parent=0 // pred_fallthru
    _
  %v4 = vld [vmem:[%s0] ss:$0 sm:$0xff]
  %5 = vst [vmem:[%s1] sm:$0xff] %v4
  %s6 = scalar_lea.vmem %s1, 8
  %7 = vst [vmem:[%s6] sm:$0xff] %v4

// kernel: tile.19
$region0: #{tile.19}
  %s0 = inlined_call_operand.vmem [shape: f32[16,4], index: 0, kind: input, shape index: {}]
  %s1 = inlined_call_operand.vmem [shape: f32[1,64], index: 1, kind: output, shape index: {}]
  $region1: #{tile.19} parent=0
    #allocation0 [shape = 'u8[4096]{0}', space=vmem, size = 0x1000, scoped, tag = 'scoped mem for output reshape']
    %v2 = vld [vmem:[%s0] sm:$0x1]
    %vm3 = vcmask 31744
    %4 = vst.msk [vmem:[#allocation0] sm:$0x1] %vm3, %v2
    %s5 = scalar_lea.vmem %s0, 15
    %v6 = vld [vmem:[%s5] sm:$0x1]
    %7 = vrot.lane.b32.xlu0 %v6, 60
    %v8 = vpop.permute.xlu0 %7
    %vm9 = vcmask 523744
    %10 = vst.msk [vmem:[#allocation0] sm:$0x1] %vm9, %v8
    %s11 = scalar_lea.vmem %s0, 14
    %v12 = vld [vmem:[%s11] sm:$0x1]
    %13 = vrot.lane.b32.xlu0 %v12, 56
    %v14 = vpop.permute.xlu0 %13
    %vm15 = vcmask 490944
    %16 = vst.msk [vmem:[#allocation0] sm:$0x1] %vm15, %v14
    %s17 = scalar_lea.vmem %s0, 13
    %v18 = vld [vmem:[%s17] sm:$0x1]
    %19 = vrot.lane.b32.xlu0 %v18, 52
    %v20 = vpop.permute.xlu0 %19
    %vm21 = vcmask 458144
    %22 = vst.msk [vmem:[#allocation0] sm:$0x1] %vm21, %v20
    %s23 = scalar_lea.vmem %s0, 12
    %v24 = vld [vmem:[%s23] sm:$0x1]
    %25 = vrot.lane.b32.xlu0 %v24, 48
    %v26 = vpop.permute.xlu0 %25
    %vm27 = vcmask 425344
    %28 = vst.msk [vmem:[#allocation0] sm:$0x1] %vm27, %v26
    %s29 = scalar_lea.vmem %s0, 11
    %v30 = vld [vmem:[%s29] sm:$0x1]
    %31 = vrot.lane.b32.xlu0 %v30, 44
    %v32 = vpop.permute.xlu0 %31
    %vm33 = vcmask 392544
    %34 = vst.msk [vmem:[#allocation0] sm:$0x1] %vm33, %v32
    %s35 = scalar_lea.vmem %s0, 10
    %v36 = vld [vmem:[%s35] sm:$0x1]
    %37 = vrot.lane.b32.xlu0 %v36, 40
    %v38 = vpop.permute.xlu0 %37
    %vm39 = vcmask 359744
    %40 = vst.msk [vmem:[#allocation0] sm:$0x1] %vm39, %v38
    %s41 = scalar_lea.vmem %s0, 9
    %v42 = vld [vmem:[%s41] sm:$0x1]
    %43 = vrot.lane.b32.xlu0 %v42, 36
    %v44 = vpop.permute.xlu0 %43
    %vm45 = vcmask 326944
    %46 = vst.msk [vmem:[#allocation0] sm:$0x1] %vm45, %v44
    %s47 = scalar_lea.vmem %s0, 8
    %v48 = vld [vmem:[%s47] sm:$0x1]
    %49 = vrot.lane.b32.xlu0 %v48, 32
    %v50 = vpop.permute.xlu0 %49
    %vm51 = vcmask 294144
    %52 = vst.msk [vmem:[#allocation0] sm:$0x1] %vm51, %v50
    %s53 = scalar_lea.vmem %s0, 7
    %v54 = vld [vmem:[%s53] sm:$0x1]
    %55 = vrot.lane.b32.xlu0 %v54, 28
    %v56 = vpop.permute.xlu0 %55
    %vm57 = vcmask 261344
    %58 = vst.msk [vmem:[#allocation0] sm:$0x1] %vm57, %v56
    %s59 = scalar_lea.vmem %s0, 6
    %v60 = vld [vmem:[%s59] sm:$0x1]
    %61 = vrot.lane.b32.xlu0 %v60, 24
    %v62 = vpop.permute.xlu0 %61
    %vm63 = vcmask 228544
    %64 = vst.msk [vmem:[#allocation0] sm:$0x1] %vm63, %v62
    %s65 = scalar_lea.vmem %s0, 5
    %v66 = vld [vmem:[%s65] sm:$0x1]
    %67 = vrot.lane.b32.xlu0 %v66, 20
    %v68 = vpop.permute.xlu0 %67
    %vm69 = vcmask 195744
    %70 = vst.msk [vmem:[#allocation0] sm:$0x1] %vm69, %v68
    %s71 = scalar_lea.vmem %s0, 4
    %v72 = vld [vmem:[%s71] sm:$0x1]
    %73 = vrot.lane.b32.xlu0 %v72, 16
    %v74 = vpop.permute.xlu0 %73
    %vm75 = vcmask 162944
    %76 = vst.msk [vmem:[#allocation0] sm:$0x1] %vm75, %v74
    %s77 = scalar_lea.vmem %s0, 3
    %v78 = vld [vmem:[%s77] sm:$0x1]
    %79 = vrot.lane.b32.xlu0 %v78, 12
    %v80 = vpop.permute.xlu0 %79
    %vm81 = vcmask 130144
    %82 = vst.msk [vmem:[#allocation0] sm:$0x1] %vm81, %v80
    %s83 = scalar_lea.vmem %s0, 2
    %v84 = vld [vmem:[%s83] sm:$0x1]
    %85 = vrot.lane.b32.xlu0 %v84, 8
    %v86 = vpop.permute.xlu0 %85
    %vm87 = vcmask 97344
    %88 = vst.msk [vmem:[#allocation0] sm:$0x1] %vm87, %v86
    %s89 = scalar_lea.vmem %s0, 1
    %v90 = vld [vmem:[%s89] sm:$0x1]
    %91 = vrot.lane.b32.xlu0 %v90, 4
    %v92 = vpop.permute.xlu0 %91
    %vm93 = vcmask 64544
    %94 = vst.msk [vmem:[#allocation0] sm:$0x1] %vm93, %v92
    %s96 = sshll.u32 1, 1
    %s97 = ssub.s32 %s96, 1
    %v99 = vld [vmem:[#allocation0] sm:%s97]
    %s100 = sshll.u32 1, 1
    %s101 = ssub.s32 %s100, 1
    %102 = vst [vmem:[%s1] sm:%s101] %v99

// kernel: classifier_forward.1
$region0: #{classifier_forward.1}
  #allocation0 [shape = 'u32[]', space=smem, size = 0x4, offset = 0x4, fixed_abs, tag = 'smem constant byte address 0x4 - core index']
  #allocation1 [shape = 'u32[144,128]{1,0:T(1,128)}', space=vmem, size = 0x12000, scoped, tag = 'internal scratch']
  %s0 = inlined_call_operand.vmem [shape: f32[8,128], index: 0, kind: input, shape index: {}]
  %s1 = inlined_call_operand.vmem [shape: f32[128,64], index: 1, kind: input, shape index: {}]
  %s2 = inlined_call_operand.vmem [shape: f32[1,64], index: 2, kind: input, shape index: {}]
  %s3 = inlined_call_operand.vmem [shape: f32[64,64], index: 3, kind: input, shape index: {}]
  %s4 = inlined_call_operand.vmem [shape: f32[1,64], index: 4, kind: input, shape index: {}]
  %s5 = inlined_call_operand.vmem [shape: f32[64,16], index: 5, kind: input, shape index: {}]
  %s6 = inlined_call_operand.vmem [shape: f32[1,16], index: 6, kind: input, shape index: {}]
  %s7 = inlined_call_operand.vmem [shape: f32[8,16], index: 7, kind: output, shape index: {}]
  %s8 = sld [smem:[#allocation0]]
  $region38: #{classifier_forward.1} parent=0
    _
  %s10 = ssub.s32 1, %s8
  %s11 = scalar_select 0, %s10, %s8
  // Predicated region
  $region2: #{classifier_forward.1} parent=0 // pred_check
    _
  $region3: #{classifier_forward.1} parent=0 // pred_check_branch
    %13 = sbr.rel (0) target = $region5
  $region4: #{classifier_forward.1} parent=0 // pred_region
    _
  $region5: #{classifier_forward.1} parent=0 // pred_fallthru
    _
  // Predicated region
  $region6: #{classifier_forward.1} parent=0 // pred_check
    _
  $region7: #{classifier_forward.1} parent=0 // pred_check_branch
    %15 = sbr.rel (0) target = $region9
  $region8: #{classifier_forward.1} parent=0 // pred_region
    _
  $region9: #{classifier_forward.1} parent=0 // pred_fallthru
    _
  // Predicated region
  $region10: #{classifier_forward.1} parent=0 // pred_check
    _
  $region11: #{classifier_forward.1} parent=0 // pred_check_branch
    %17 = sbr.rel (0) target = $region13
  $region12: #{classifier_forward.1} parent=0 // pred_region
    _
  $region13: #{classifier_forward.1} parent=0 // pred_fallthru
    _
  // Predicated region
  $region14: #{classifier_forward.1} parent=0 // pred_check
    _
  $region15: #{classifier_forward.1} parent=0 // pred_check_branch
    %19 = sbr.rel (0) target = $region17
  $region16: #{classifier_forward.1} parent=0 // pred_region
    _
  $region17: #{classifier_forward.1} parent=0 // pred_fallthru
    _
  // Predicated region
  $region18: #{classifier_forward.1} parent=0 // pred_check
    _
  $region19: #{classifier_forward.1} parent=0 // pred_check_branch
    %21 = sbr.rel (0) target = $region21
  $region20: #{classifier_forward.1} parent=0 // pred_region
    _
  $region21: #{classifier_forward.1} parent=0 // pred_fallthru
    _
  // Predicated region
  $region22: #{classifier_forward.1} parent=0 // pred_check
    _
  $region23: #{classifier_forward.1} parent=0 // pred_check_branch
    %23 = sbr.rel (0) target = $region25
  $region24: #{classifier_forward.1} parent=0 // pred_region
    _
  $region25: #{classifier_forward.1} parent=0 // pred_fallthru
    _
  // Predicated region
  $region26: #{classifier_forward.1} parent=0 // pred_check
    _
  $region27: #{classifier_forward.1} parent=0 // pred_check_branch
    %25 = sbr.rel (0) target = $region29
  $region28: #{classifier_forward.1} parent=0 // pred_region
    _
  $region29: #{classifier_forward.1} parent=0 // pred_fallthru
    _
  %v26 = vld [vmem:[%s0] sm:$0xff]
  %v27 = vld [vmem:[%s1] sm:$0xff]
  %v28 = vld [vmem:[%s1 + $0x8] sm:$0xff]
  %v29 = vld [vmem:[%s1 + $0x10] sm:$0xff]
  %v30 = vld [vmem:[%s1 + $0x18] sm:$0xff]
  %v31 = vld [vmem:[%s1 + $0x20] sm:$0xff]
  %v32 = vld [vmem:[%s1 + $0x28] sm:$0xff]
  %v33 = vld [vmem:[%s1 + $0x30] sm:$0xff]
  %v34 = vld [vmem:[%s1 + $0x38] sm:$0xff]
  %v35 = vld [vmem:[%s1 + $0x40] sm:$0xff]
  %v36 = vld [vmem:[%s1 + $0x48] sm:$0xff]
  %v37 = vld [vmem:[%s1 + $0x50] sm:$0xff]
  %v38 = vld [vmem:[%s1 + $0x58] sm:$0xff]
  %v39 = vld [vmem:[%s1 + $0x60] sm:$0xff]
  %v40 = vld [vmem:[%s1 + $0x68] sm:$0xff]
  %v41 = vld [vmem:[%s1 + $0x70] sm:$0xff]
  %v42 = vld [vmem:[%s1 + $0x78] sm:$0xff]
  %v43 = vld [vmem:[%s2] sm:$0x1]
  %v45 = vlaneseq
  %v46 = vshrl.u32 %v45, 7
  %v47 = vsub.s32 0, %v46
  %v48 = vrot.slane %v43, %v47
  %50 = vmatprep.subr.mxu0 0.0
  %51 = vmatpush1.msra.mxu0 %v42
  %52 = vmatprep.subr.mxu0 0.0
  %53 = vmatpush1.msra.mxu0 %v41
  %54 = vmatprep.subr.mxu0 0.0
  %55 = vmatpush1.msra.mxu0 %v40
  %56 = vmatprep.subr.mxu0 0.0
  %57 = vmatpush1.msra.mxu0 %v39
  %58 = vmatprep.subr.mxu0 0.0
  %59 = vmatpush1.msra.mxu0 %v38
  %60 = vmatprep.subr.mxu0 0.0
  %61 = vmatpush1.msra.mxu0 %v37
  %62 = vmatprep.subr.mxu0 0.0
  %63 = vmatpush1.msra.mxu0 %v36
  %64 = vmatprep.subr.mxu0 0.0
  %65 = vmatpush1.msra.mxu0 %v35
  %66 = vmatprep.subr.mxu0 0.0
  %67 = vmatpush1.msra.mxu0 %v34
  %68 = vmatprep.subr.mxu0 0.0
  %69 = vmatpush1.msra.mxu0 %v33
  %70 = vmatprep.subr.mxu0 0.0
  %71 = vmatpush1.msra.mxu0 %v32
  %72 = vmatprep.subr.mxu0 0.0
  %73 = vmatpush1.msra.mxu0 %v31
  %74 = vmatprep.subr.mxu0 0.0
  %75 = vmatpush1.msra.mxu0 %v30
  %76 = vmatprep.subr.mxu0 0.0
  %77 = vmatpush1.msra.mxu0 %v29
  %78 = vmatprep.subr.mxu0 0.0
  %79 = vmatpush1.msra.mxu0 %v28
  %80 = vmatprep.subr.mxu0 0.0
  %81 = vmatpush1.msra.mxu0 %v27
  %82 = vmatprep.subr.mxu0 0.0
  %83 = vmatpush2.msra.mxu0 0.0
  %84 = vmatprep.subr.mxu0 0.0
  %85 = vmatpush2.msra.mxu0 0.0
  %86 = vmatprep.subr.mxu0 0.0
  %87 = vmatpush2.msra.mxu0 0.0
  %88 = vmatprep.subr.mxu0 0.0
  %89 = vmatpush2.msra.mxu0 0.0
  %90 = vmatprep.subr.mxu0 0.0
  %91 = vmatpush2.msra.mxu0 0.0
  %92 = vmatprep.subr.mxu0 0.0
  %93 = vmatpush2.msra.mxu0 0.0
  %94 = vmatprep.subr.mxu0 0.0
  %95 = vmatpush2.msra.mxu0 0.0
  %96 = vmatprep.subr.mxu0 0.0
  %97 = vmatpush2.msra.mxu0 0.0
  %98 = vmatprep.subr.mxu0 0.0
  %99 = vmatpush2.msra.mxu0 0.0
  %100 = vmatprep.subr.mxu0 0.0
  %101 = vmatpush2.msra.mxu0 0.0
  %102 = vmatprep.subr.mxu0 0.0
  %103 = vmatpush2.msra.mxu0 0.0
  %104 = vmatprep.subr.mxu0 0.0
  %105 = vmatpush2.msra.mxu0 0.0
  %106 = vmatprep.subr.mxu0 0.0
  %107 = vmatpush2.msra.mxu0 0.0
  %108 = vmatprep.subr.mxu0 0.0
  %109 = vmatpush2.msra.mxu0 0.0
  %110 = vmatprep.subr.mxu0 0.0
  %111 = vmatpush2.msra.mxu0 0.0
  %112 = vmatprep.subr.mxu0 0.0
  %113 = vmatpush2.msra.mxu0 0.0
  %114 = vmatprep.mubr.f32.mxu0 0.0
  %115 = vmatmul.mubr.f32.gmra.mxu0 %v26
  %v116 = vpop.f32.mrf.mxu0
  %v117 = vadd.f32 %v48, %v116
  %v118 = vpop.f32.mrf.mxu0
  %119 = vdwg.mxu0
  %v120 = vmax.f32 %v117, 0.0
  %v121 = vld [vmem:[%s3] sm:$0xff]
  %v122 = vld [vmem:[%s3 + $0x8] sm:$0xff]
  %v123 = vld [vmem:[%s3 + $0x10] sm:$0xff]
  %v124 = vld [vmem:[%s3 + $0x18] sm:$0xff]
  %v125 = vld [vmem:[%s3 + $0x20] sm:$0xff]
  %v126 = vld [vmem:[%s3 + $0x28] sm:$0xff]
  %v127 = vld [vmem:[%s3 + $0x30] sm:$0xff]
  %v128 = vld [vmem:[%s3 + $0x38] sm:$0xff]
  %v129 = vld [vmem:[%s4] sm:$0x1]
  %v131 = vlaneseq
  %v132 = vshrl.u32 %v131, 7
  %v133 = vsub.s32 0, %v132
  %v134 = vrot.slane %v129, %v133
  %vm136 = vcmask 523264
  %v138 = vsel %vm136, %v120, 0
  %140 = vmatprep.subr.mxu0 0.0
  %141 = vmatpush1.msra.mxu0 0.0
  %142 = vmatprep.subr.mxu0 0.0
  %143 = vmatpush1.msra.mxu0 0.0
  %144 = vmatprep.subr.mxu0 0.0
  %145 = vmatpush1.msra.mxu0 0.0
  %146 = vmatprep.subr.mxu0 0.0
  %147 = vmatpush1.msra.mxu0 0.0
  %148 = vmatprep.subr.mxu0 0.0
  %149 = vmatpush1.msra.mxu0 0.0
  %150 = vmatprep.subr.mxu0 0.0
  %151 = vmatpush1.msra.mxu0 0.0
  %152 = vmatprep.subr.mxu0 0.0
  %153 = vmatpush1.msra.mxu0 0.0
  %154 = vmatprep.subr.mxu0 0.0
  %155 = vmatpush1.msra.mxu0 0.0
  %156 = vmatprep.subr.mxu0 0.0
  %157 = vmatpush1.msra.mxu0 %v128
  %158 = vmatprep.subr.mxu0 0.0
  %159 = vmatpush1.msra.mxu0 %v127
  %160 = vmatprep.subr.mxu0 0.0
  %161 = vmatpush1.msra.mxu0 %v126
  %162 = vmatprep.subr.mxu0 0.0
  %163 = vmatpush1.msra.mxu0 %v125
  %164 = vmatprep.subr.mxu0 0.0
  %165 = vmatpush1.msra.mxu0 %v124
  %166 = vmatprep.subr.mxu0 0.0
  %167 = vmatpush1.msra.mxu0 %v123
  %168 = vmatprep.subr.mxu0 0.0
  %169 = vmatpush1.msra.mxu0 %v122
  %170 = vmatprep.subr.mxu0 0.0
  %171 = vmatpush1.msra.mxu0 %v121
  %172 = vmatprep.subr.mxu0 0.0
  %173 = vmatpush2.msra.mxu0 0.0
  %174 = vmatprep.subr.mxu0 0.0
  %175 = vmatpush2.msra.mxu0 0.0
  %176 = vmatprep.subr.mxu0 0.0
  %177 = vmatpush2.msra.mxu0 0.0
  %178 = vmatprep.subr.mxu0 0.0
  %179 = vmatpush2.msra.mxu0 0.0
  %180 = vmatprep.subr.mxu0 0.0
  %181 = vmatpush2.msra.mxu0 0.0
  %182 = vmatprep.subr.mxu0 0.0
  %183 = vmatpush2.msra.mxu0 0.0
  %184 = vmatprep.subr.mxu0 0.0
  %185 = vmatpush2.msra.mxu0 0.0
  %186 = vmatprep.subr.mxu0 0.0
  %187 = vmatpush2.msra.mxu0 0.0
  %188 = vmatprep.subr.mxu0 0.0
  %189 = vmatpush2.msra.mxu0 0.0
  %190 = vmatprep.subr.mxu0 0.0
  %191 = vmatpush2.msra.mxu0 0.0
  %192 = vmatprep.subr.mxu0 0.0
  %193 = vmatpush2.msra.mxu0 0.0
  %194 = vmatprep.subr.mxu0 0.0
  %195 = vmatpush2.msra.mxu0 0.0
  %196 = vmatprep.subr.mxu0 0.0
  %197 = vmatpush2.msra.mxu0 0.0
  %198 = vmatprep.subr.mxu0 0.0
  %199 = vmatpush2.msra.mxu0 0.0
  %200 = vmatprep.subr.mxu0 0.0
  %201 = vmatpush2.msra.mxu0 0.0
  %202 = vmatprep.subr.mxu0 0.0
  %203 = vmatpush2.msra.mxu0 0.0
  %204 = vmatprep.mubr.f32.mxu0 0.0
  %205 = vmatmul.mubr.f32.gmra.mxu0 %v138
  %v206 = vpop.f32.mrf.mxu0
  %v207 = vadd.f32 %v134, %v206
  %v208 = vpop.f32.mrf.mxu0
  %209 = vdwg.mxu0
  %v210 = vmax.f32 %v207, 0.0
  %v211 = vld [vmem:[%s5] sm:$0xff]
  %v212 = vld [vmem:[%s5 + $0x8] sm:$0xff]
  %v213 = vld [vmem:[%s5 + $0x10] sm:$0xff]
  %v214 = vld [vmem:[%s5 + $0x18] sm:$0xff]
  %v215 = vld [vmem:[%s5 + $0x20] sm:$0xff]
  %v216 = vld [vmem:[%s5 + $0x28] sm:$0xff]
  %v217 = vld [vmem:[%s5 + $0x30] sm:$0xff]
  %v218 = vld [vmem:[%s5 + $0x38] sm:$0xff]
  %v219 = vld [vmem:[%s6] sm:$0x1]
  %v221 = vlaneseq
  %v222 = vshrl.u32 %v221, 7
  %v223 = vsub.s32 0, %v222
  %v224 = vrot.slane %v219, %v223
  %v227 = vsel %vm136, %v210, 0
  %229 = vmatprep.subr.mxu0 0.0
  %230 = vmatpush1.msra.mxu0 0.0
  %231 = vmatprep.subr.mxu0 0.0
  %232 = vmatpush1.msra.mxu0 0.0
  %233 = vmatprep.subr.mxu0 0.0
  %234 = vmatpush1.msra.mxu0 0.0
  %235 = vmatprep.subr.mxu0 0.0
  %236 = vmatpush1.msra.mxu0 0.0
  %237 = vmatprep.subr.mxu0 0.0
  %238 = vmatpush1.msra.mxu0 0.0
  %239 = vmatprep.subr.mxu0 0.0
  %240 = vmatpush1.msra.mxu0 0.0
  %241 = vmatprep.subr.mxu0 0.0
  %242 = vmatpush1.msra.mxu0 0.0
  %243 = vmatprep.subr.mxu0 0.0
  %244 = vmatpush1.msra.mxu0 0.0
  %245 = vmatprep.subr.mxu0 0.0
  %246 = vmatpush1.msra.mxu0 %v218
  %247 = vmatprep.subr.mxu0 0.0
  %248 = vmatpush1.msra.mxu0 %v217
  %249 = vmatprep.subr.mxu0 0.0
  %250 = vmatpush1.msra.mxu0 %v216
  %251 = vmatprep.subr.mxu0 0.0
  %252 = vmatpush1.msra.mxu0 %v215
  %253 = vmatprep.subr.mxu0 0.0
  %254 = vmatpush1.msra.mxu0 %v214
  %255 = vmatprep.subr.mxu0 0.0
  %256 = vmatpush1.msra.mxu0 %v213
  %257 = vmatprep.subr.mxu0 0.0
  %258 = vmatpush1.msra.mxu0 %v212
  %259 = vmatprep.subr.mxu0 0.0
  %260 = vmatpush1.msra.mxu0 %v211
  %261 = vmatprep.subr.mxu0 0.0
  %262 = vmatpush2.msra.mxu0 0.0
  %263 = vmatprep.subr.mxu0 0.0
  %264 = vmatpush2.msra.mxu0 0.0
  %265 = vmatprep.subr.mxu0 0.0
  %266 = vmatpush2.msra.mxu0 0.0
  %267 = vmatprep.subr.mxu0 0.0
  %268 = vmatpush2.msra.mxu0 0.0
  %269 = vmatprep.subr.mxu0 0.0
  %270 = vmatpush2.msra.mxu0 0.0
  %271 = vmatprep.subr.mxu0 0.0
  %272 = vmatpush2.msra.mxu0 0.0
  %273 = vmatprep.subr.mxu0 0.0
  %274 = vmatpush2.msra.mxu0 0.0
  %275 = vmatprep.subr.mxu0 0.0
  %276 = vmatpush2.msra.mxu0 0.0
  %277 = vmatprep.subr.mxu0 0.0
  %278 = vmatpush2.msra.mxu0 0.0
  %279 = vmatprep.subr.mxu0 0.0
  %280 = vmatpush2.msra.mxu0 0.0
  %281 = vmatprep.subr.mxu0 0.0
  %282 = vmatpush2.msra.mxu0 0.0
  %283 = vmatprep.subr.mxu0 0.0
  %284 = vmatpush2.msra.mxu0 0.0
  %285 = vmatprep.subr.mxu0 0.0
  %286 = vmatpush2.msra.mxu0 0.0
  %287 = vmatprep.subr.mxu0 0.0
  %288 = vmatpush2.msra.mxu0 0.0
  %289 = vmatprep.subr.mxu0 0.0
  %290 = vmatpush2.msra.mxu0 0.0
  %291 = vmatprep.subr.mxu0 0.0
  %292 = vmatpush2.msra.mxu0 0.0
  %293 = vmatprep.mubr.f32.mxu0 0.0
  %294 = vmatmul.mubr.f32.gmra.mxu0 %v227
  %v295 = vpop.f32.mrf.mxu0
  %v296 = vadd.f32 %v224, %v295
  %v297 = vpop.f32.mrf.mxu0
  %298 = vdwg.mxu0
  %v299 = vmul.f32 %v296, 0.5
  %v300 = vtanh.pop %v299
  %v301 = vmul.f32 %v300, 0.5
  %v302 = vadd.f32 %v301, 0.5
  %vm303 = vcmask 130048
  %304 = vst.msk [vmem:[%s7] sm:$0xff] %vm303, %v302
  // Predicated region
  $region30: #{classifier_forward.1} parent=0 // pred_check
    _
  $region31: #{classifier_forward.1} parent=0 // pred_check_branch
    %306 = sbr.rel (0) target = $region33
  $region32: #{classifier_forward.1} parent=0 // pred_region
    _
  $region33: #{classifier_forward.1} parent=0 // pred_fallthru
    _
  // Predicated region
  $region34: #{classifier_forward.1} parent=0 // pred_check
    _
  $region35: #{classifier_forward.1} parent=0 // pred_check_branch
    %308 = sbr.rel (0) target = $region37
  $region36: #{classifier_forward.1} parent=0 // pred_region
    _
  $region37: #{classifier_forward.1} parent=0 // pred_fallthru
    _

</llo_original>
